<compile_context>
chip_gen: v7x
topology: tpu7x:2x2x1
jax: 0.10.0
libtpu: 0.0.40
codegen_flags: <defaults>
</compile_context>

<pallas_src>
import jax
import jax.numpy as jnp
from jax.experimental import pallas as pl
from jax.experimental.pallas import tpu as pltpu


def _copy_kernel(x_ref, o_ref):
    # Pure forward: copy the whole VMEM tile.
    o_ref[...] = x_ref[...]


_MAX_BLOCK_BYTES = 8 * 1024 * 1024       # 2 (in/out) x 2 (double-buffer) x 8 MiB = 32 MiB
_VMEM_LIMIT_BYTES = 40 * 1024 * 1024     # < 64 MiB (v7x physical), << 128 MiB (v5e/v6e)
_COL_CANDIDATES = (8192, 4096, 2048, 1024, 512, 256, 128)
# Native-dtype sublane multiples per itemsize (no bitcast needed).
_SUBLANE = {4: 8, 2: 16, 1: 32}


def _pick_tile_rows(rows: int, cols: int, itemsize: int, sub: int) -> int:
    """Tile height: multiple of `sub`, under the block-byte cap, ~4+ grid steps for
    mid-size buffers, preferring exact divisors and an even grid length (v7x 2-TC)."""
    cap = max(sub, (_MAX_BLOCK_BYTES // (cols * itemsize)) // sub * sub)
    if rows <= sub:
        return rows  # single full-extent block
    # Aim for >= 4 pipeline steps so DMAs overlap across grid iterations.
    four_step = max(sub, ((rows + 3) // 4 + sub - 1) // sub * sub)
    cand = min(max(sub, rows // sub * sub), cap, four_step)
    best = None
    t = cand
    while t >= sub:
        if rows % t == 0:
            g = rows // t
            if g % 2 == 0:       # even grid: balanced across v7x's two TensorCores
                return t
            if best is None:
                best = t
        t -= sub
    # No exact divisor found: ragged tail handled by pl.cdiv partial-block masking.
    return best if best is not None else cand


def _pallas_copy(x: jax.Array) -> jax.Array:
    """HBM-roofline copy via Pallas; falls back to `x` for awkward shapes/dtypes."""
    n = x.size
    itemsize = jnp.dtype(x.dtype).itemsize
    sub = _SUBLANE.get(itemsize)
    if n == 0 or sub is None or x.dtype == jnp.dtype(bool) or n % 128 != 0:
        return x  # no pad-free lane-dense slab: identity is exact and free

    # Lane-dense column width: prefer one where rows is a clean sublane multiple.
    cols = None
    for c in _COL_CANDIDATES:
        if n % c == 0 and (n // c) % sub == 0:
            cols = c
            break
    if cols is None:
        for c in _COL_CANDIDATES:
            if n % c == 0:
                cols = c
                break
    if cols is None:
        return x

    rows = n // cols
    tile_rows = _pick_tile_rows(rows, cols, itemsize, sub)

    x2d = x.reshape(rows, cols)  # native dtype, no bitcast round trip
    out2d = pl.pallas_call(
        _copy_kernel,
        out_shape=jax.ShapeDtypeStruct((rows, cols), x.dtype),
        grid=(pl.cdiv(rows, tile_rows),),
        in_specs=[pl.BlockSpec((tile_rows, cols), lambda i: (i, 0))],
        out_specs=pl.BlockSpec((tile_rows, cols), lambda i: (i, 0)),
        compiler_params=pltpu.CompilerParams(
            dimension_semantics=("parallel",),
            vmem_limit_bytes=_VMEM_LIMIT_BYTES,
        ),
    )(x2d)
    return out2d.reshape(x.shape)


def none_transform(x: jax.Array, *, materialize: bool = False) -> jax.Array:
    """None_Transform.forward: pure identity.

    Default path returns x unchanged (zero HBM bytes moved -- the dominant
    optimization for an identity op, and exactly the PyTorch semantics).
    Set materialize=True only if a distinct output buffer is required; that path
    runs an HBM-roofline Pallas copy kernel.
    """
    if not materialize:
        return x
    return _pallas_copy(x)


if __name__ == "__main__":
    key = jax.random.PRNGKey(0)
    # Small NCHW-like input consistent with an augmentation transform.
    x = jax.random.normal(key, (2, 4, 16, 16), dtype=jnp.float32)

    # Fast path: exact identity (same buffer, zero bytes moved).
    y_fast = none_transform(x)
    jax.block_until_ready(y_fast)
    assert y_fast.shape == x.shape and y_fast.dtype == x.dtype
    assert bool(jnp.all(y_fast == x))

    # Materialized path: exercise the Pallas copy kernel once.
    y = none_transform(x, materialize=True)
    jax.block_until_ready(y)
    assert y.shape == x.shape and y.dtype == x.dtype
    assert bool(jnp.all(y == x))

    # Sub-32-bit dtype: copied in native bf16 (sublane multiple of 16, no bitcast).
    xb = jax.random.normal(jax.random.PRNGKey(0), (4, 64, 128), dtype=jnp.bfloat16)
    yb = none_transform(xb, materialize=True)
    jax.block_until_ready(yb)
    assert yb.shape == xb.shape and yb.dtype == xb.dtype
    assert bool(jnp.all(yb == xb))

    print("KERNEL_OK")
</pallas_src>

<mosaic_0001>
module attributes {stable_mosaic.version = 11 : i64} {
  func.func @_copy_kernel(%arg0: i32, %arg1: memref<8x256xf32, #tpu.memory_space<vmem>>, %arg2: memref<8x256xf32, #tpu.memory_space<vmem>>) attributes {dimension_semantics = [#tpu.dimension_semantics<parallel>], iteration_bounds = array<i64: 1>, scalar_prefetch = 0 : i64, scratch_operands = 0 : i64, tpu.core_type = #tpu.core_type<tc>, window_params = [{transform_indices = @transform_0, window_bounds = array<i64: 8, 256>}, {transform_indices = @transform_1, window_bounds = array<i64: 8, 256>}]} {
    %c0 = arith.constant 0 : index
    %c0_0 = arith.constant 0 : index
    %0 = vector.load %arg1[%c0, %c0_0] : memref<8x256xf32, #tpu.memory_space<vmem>>, vector<8x256xf32>
    %c0_1 = arith.constant 0 : index
    %c0_2 = arith.constant 0 : index
    %1 = vector.load %arg2[%c0_1, %c0_2] : memref<8x256xf32, #tpu.memory_space<vmem>>, vector<8x256xf32>
    tpu.vector_store %arg2[%c0_1, %c0_2], %0 {strides = array<i32>} : memref<8x256xf32, #tpu.memory_space<vmem>>, vector<8x256xf32>,
    return
  }
  func.func @transform_0(%arg0: i32) -> (i32, i32) {
    %c0_i32 = arith.constant 0 : i32
    %c0_i32_0 = arith.constant 0 : i32
    return %arg0, %c0_i32 : i32, i32
  }
  func.func @transform_1(%arg0: i32) -> (i32, i32) {
    %c0_i32 = arith.constant 0 : i32
    %c0_i32_0 = arith.constant 0 : i32
    return %arg0, %c0_i32 : i32, i32
  }
}

</mosaic_0001>

<llo_original>
// kernel: tpu_custom_call.1
$region0: #{tpu_custom_call.1}
  #allocation0 [shape = 'u32[]', space=smem, size = 0x4, offset = 0x4, fixed_abs, tag = 'smem constant byte address 0x4 - core index']
  #allocation1 [shape = 'u32[144,128]{1,0:T(1,128)}', space=vmem, size = 0x12000, scoped, tag = 'internal scratch']
  %s0 = inlined_call_operand.hbm [shape: f32[8,256], index: 0, kind: input, shape index: {}]
  %s1 = inlined_call_operand.hbm [shape: f32[8,256], index: 1, kind: output, shape index: {}]
  %s2 = sld [smem:[#allocation0]]
  $region18: #{tpu_custom_call.1} parent=0
    _
  %s4 = ssub.s32 1, %s2
  %s5 = scalar_select 0, %s4, %s2
  $region1: #{tpu_custom_call.1} parent=0
    #allocation2 [shape = 'u8[8192]{0}', space=vmem, size = 0x2000, scoped, tag = 'input window, operand 0, single buffered']
    #allocation3 [shape = 's32[1]{0}', space=sflag, size = 0x4, scoped, tag = 'scoped memory for tpu_custom_call.1']
    #allocation4 [shape = 's32[1]{0}', space=sflag, size = 0x4, scoped, tag = 'scoped memory for tpu_custom_call.1']
    #allocation5 [shape = 'u8[8192]{0}', space=vmem, size = 0x2000, scoped, tag = 'output window, operand 0, single buffered']
    %6 = vsyncpa [#allocation3], 0
    %7 = vsyncpa [#allocation4], 0
    // Predicated region
    $region2: #{tpu_custom_call.1} parent=1 // pred_check
      _
    $region3: #{tpu_custom_call.1} parent=1 // pred_check_branch
      %9 = sbr.rel (0) target = $region5
    $region4: #{tpu_custom_call.1} parent=1 // pred_region
      %s11 = ssub.s32 256, 256
      %12 = vsyncadd [#allocation3], %s11
      %s14 = sshll.u32 [#allocation2], 4
      %s15 = int_to_ptr.vmem [resolvable:$true] %s14
      %17 = dma.hbm_to_vmem [thread:$0]  %s0, 256, %s15, [#allocation3]
    $region5: #{tpu_custom_call.1} parent=1 // pred_fallthru
      _
    // Predicated region
    $region6: #{tpu_custom_call.1} parent=1 // pred_check
      _
    $region7: #{tpu_custom_call.1} parent=1 // pred_check_branch
      %19 = sbr.rel (0) target = $region9
    $region8: #{tpu_custom_call.1} parent=1 // pred_region
      %20 = dma.done [#allocation3], 256
    $region9: #{tpu_custom_call.1} parent=1 // pred_fallthru
      _
    %v21 = vld [vmem:[#allocation2] sm:$0xff]
    %v22 = vld [vmem:[#allocation2 + $0x8] sm:$0xff]
    %23 = vst [vmem:[#allocation5] sm:$0xff] %v21
    %24 = vst [vmem:[#allocation5 + $0x8] sm:$0xff] %v22
    // Predicated region
    $region10: #{tpu_custom_call.1} parent=1 // pred_check
      _
    $region11: #{tpu_custom_call.1} parent=1 // pred_check_branch
      %26 = sbr.rel (0) target = $region13
    $region12: #{tpu_custom_call.1} parent=1 // pred_region
      %s28 = ssub.s32 256, 256
      %29 = vsyncadd [#allocation4], %s28
      %s31 = sshll.u32 [#allocation5], 4
      %s32 = int_to_ptr.vmem [resolvable:$true] %s31
      %34 = dma.vmem_to_hbm [thread:$0]  %s32, 256, %s1, [#allocation4]
    $region13: #{tpu_custom_call.1} parent=1 // pred_fallthru
      _
    // Predicated region
    $region14: #{tpu_custom_call.1} parent=1 // pred_check
      _
    $region15: #{tpu_custom_call.1} parent=1 // pred_check_branch
      %36 = sbr.rel (0) target = $region17
    $region16: #{tpu_custom_call.1} parent=1 // pred_region
      %37 = dma.done [#allocation4], 256
    $region17: #{tpu_custom_call.1} parent=1 // pred_fallthru
      _
    %38 = vsyncpa [#allocation3], 1
    %39 = vsyncpa [#allocation4], 1

</llo_original>
